<compile_context>
chip_gen: v7x
topology: tpu7x:2x2x1
jax: 0.10.0
libtpu: 0.0.40
codegen_flags: <defaults>
</compile_context>

<pallas_src>
import functools
import math

import jax
import jax.numpy as jnp
from jax.experimental import pallas as pl
from jax.experimental.pallas import tpu as pltpu

EPSILON = 1e-12


def _mhce_kernel(x_ref, t_ref, out_ref, acc_ref, *, hw_tile, total_cols,
                 tiles_per_split, need_col_mask):
    """One (1, C, hw_tile) block: per-column log-softmax NLL, accumulated in VMEM.

    acc_ref is a (2, hw_tile) f32 per-lane accumulator:
      row 0: running per-lane loss sum, row 1: running per-lane invalid-mask sum.
    On the last reduction step it is folded to a (1, 1, 2, 1) partial so the
    HBM writeback is tiny regardless of hw_tile.
    """
    s = pl.program_id(1)  # spatial "parallel" split (megacore work on v7x)
    j = pl.program_id(2)  # spatial-tile reduction axis ("arbitrary")

    @pl.when(j == 0)
    def _():
        acc_ref[...] = jnp.zeros_like(acc_ref)

    # Cast in-kernel (free on the VPU); inputs stream from HBM in native dtype
    # (x typically f32/bf16, target int8/bool multi-hot mask).
    x = x_ref[0].astype(jnp.float32)  # (C, hw_tile)
    t = t_ref[0].astype(jnp.float32)  # (C, hw_tile)

    # Stable log-sum-exp over the channel (sublane) axis.
    m = jnp.max(x, axis=0, keepdims=True)                              # (1, hw_tile)
    lse = m + jnp.log(jnp.sum(jnp.exp(x - m), axis=0, keepdims=True))  # (1, hw_tile)

    t_sum = jnp.sum(t, axis=0, keepdims=True)                          # (1, hw_tile)
    tx = jnp.sum(t * x, axis=0, keepdims=True)                         # (1, hw_tile)

    # Folded NLL numerator: sum(t * (x - lse)) == sum(t*x) - sum(t)*lse
    # (avoids materializing the full (C, hw_tile) log-softmax temporary).
    num = tx - t_sum * lse
    mask_inv = (t_sum == 0.0).astype(jnp.float32)
    # True select: empty-target pixels contribute 0 (no NaN from 0/0 branch).
    loss_px = jnp.where(t_sum > 0.0, -num / t_sum, 0.0)                # (1, hw_tile)

    if need_col_mask:
        # Mask columns past H*W: the ragged last tile reads out-of-bounds
        # garbage and phantom split tiles alias the last real tile; jnp.where
        # (a true select) safely discards both — do NOT replace with
        # multiply-by-zero masking or NaN/Inf garbage leaks.
        tile_idx = s * tiles_per_split + j
        col = jax.lax.broadcasted_iota(jnp.int32, (1, hw_tile), 1) + tile_idx * hw_tile
        valid = col < total_cols
        loss_px = jnp.where(valid, loss_px, 0.0)
        mask_inv = jnp.where(valid, mask_inv, 0.0)

    acc_ref[0:1, :] += loss_px
    acc_ref[1:2, :] += mask_inv

    @pl.when(j == pl.num_programs(2) - 1)
    def _():
        # Fold the per-lane accumulator to two scalars per (batch, split):
        # bounded writeback even when hw_tile is pushed toward H*W.
        out_ref[...] = jnp.sum(acc_ref[...], axis=1, keepdims=True).reshape(1, 1, 2, 1)


def _vmem_capacity_bytes():
    """Per-core VMEM capacity (v5e/v6e: 128 MiB, v7x: 64 MiB); conservative fallback."""
    try:
        info = pltpu.get_tpu_info()
        for attr in ("vmem_capacity_bytes", "vmem_size_bytes", "vmem_bytes"):
            v = getattr(info, attr, None)
            if v:
                return int(v)
    except Exception:
        pass
    return 64 << 20  # conservative: v7x per-TensorCore VMEM


def _pick_hw_tile(hw, c, x_item, t_item, vmem_budget_bytes, step_bytes_target,
                  max_tile):
    """Byte-targeted lane-tile sizing for a pure HBM-streaming kernel.

    Per-step input bytes ~= C * tile * (x_item + t_item); aim for
    `step_bytes_target` per grid step so the fixed ~0.35 us per-step cost is
    amortised, capped by a VMEM budget that accounts for double-buffered
    inputs, the in-kernel f32 working set and the per-lane accumulator.
    """
    per_lane_step = c * (x_item + t_item)
    per_lane_vmem = 2 * c * (x_item + t_item) + 4 * c * 4 + 16
    tile = min(step_bytes_target // max(per_lane_step, 1),
               vmem_budget_bytes // max(per_lane_vmem, 1),
               max_tile)
    if tile >= hw:
        return hw  # full-extent last dim is always a legal block
    # TODO(synk): for C so large that even 128 lanes exceed the VMEM budget,
    # add a channel-tiled online-LSE (flash-style running max/sum) fallback.
    return max(128, int(tile) // 128 * 128)


def multi_hot_cross_entropy_loss(x, target, reduction="mean", *,
                                 spatial_splits=2,
                                 step_bytes_target=4 << 20,
                                 max_hw_tile=1 << 16):
    """x, target: (B, C, *spatial). Returns scalar loss (reduction='mean'/'sum')."""
    assert x.shape == target.shape
    B, C = x.shape[0], x.shape[1]
    HW = int(math.prod(x.shape[2:]))

    # Free reshapes (contiguous NCHW); no transpose, no pad, no dtype copy in HBM.
    x3 = x.reshape(B, C, HW)
    t3 = target.reshape(B, C, HW)

    # Generation-aware VMEM budgeting: ~48 MiB limit on v7x (64 MiB/TC),
    # up to ~96 MiB on v5e/v6e (128 MiB).
    vmem_cap = _vmem_capacity_bytes()
    vmem_limit = int(min(vmem_cap * 3 // 4, 96 << 20))
    tile_budget = vmem_limit // 2

    hw_tile = _pick_hw_tile(HW, C, x3.dtype.itemsize, t3.dtype.itemsize,
                            tile_budget, step_bytes_target, max_hw_tile)
    num_hw_tiles = pl.cdiv(HW, hw_tile)

    # Spatial "parallel" split so v7x's second TensorCore has work when B is
    # small.  Phantom tiles (coverage overshoot) are clamped in the index_map
    # and fully masked in-kernel.
    n_splits = spatial_splits if (spatial_splits > 1 and num_hw_tiles > 1) else 1
    tiles_per_split = pl.cdiv(num_hw_tiles, n_splits)
    need_col_mask = (n_splits * tiles_per_split * hw_tile != HW)

    kernel = functools.partial(
        _mhce_kernel, hw_tile=hw_tile, total_cols=HW,
        tiles_per_split=tiles_per_split, need_col_mask=need_col_mask)

    def _in_map(b, s, j):
        # Clamp phantom tiles onto the last real block; their columns are
        # masked out in the kernel via the unclamped tile index.
        return (b, 0, jnp.minimum(s * tiles_per_split + j, num_hw_tiles - 1))

    in_block_kwargs = {}
    if hw_tile <= 256 and num_hw_tiles > 2:
        # Large-C / small-tile floor: deepen buffering to hide exposed DMA.
        in_block_kwargs["pipeline_mode"] = pl.Buffered(3)

    bytes_in = x3.size * x3.dtype.itemsize + t3.size * t3.dtype.itemsize
    bytes_out = B * n_splits * 2 * 4
    cost = pl.CostEstimate(
        flops=8 * B * C * HW,
        transcendentals=B * (C + 1) * HW,
        bytes_accessed=bytes_in + bytes_out)

    partials = pl.pallas_call(
        kernel,
        out_shape=jax.ShapeDtypeStruct((B, n_splits, 2, 1), jnp.float32),
        grid_spec=pltpu.PrefetchScalarGridSpec(
            num_scalar_prefetch=0,
            grid=(B, n_splits, tiles_per_split),
            in_specs=[
                pl.BlockSpec((1, C, hw_tile), _in_map, **in_block_kwargs),
                pl.BlockSpec((1, C, hw_tile), _in_map, **in_block_kwargs),
            ],
            out_specs=pl.BlockSpec((1, 1, 2, 1), lambda b, s, j: (b, s, 0, 0)),
            scratch_shapes=[pltpu.VMEM((2, hw_tile), jnp.float32)],
        ),
        compiler_params=pltpu.CompilerParams(
            # Batch and spatial-split axes index their own output block ->
            # parallel (megacore sharding); the tile axis carries the resident
            # accumulator -> arbitrary (reduction axis last).
            dimension_semantics=("parallel", "parallel", "arbitrary"),
            vmem_limit_bytes=vmem_limit,
        ),
        cost_estimate=cost,
    )(x3, t3)

    # Tiny final reduction (2 scalars per batch element per split) in plain JAX.
    loss_sum = jnp.sum(partials[:, :, 0, 0])
    mask_sum = jnp.sum(partials[:, :, 1, 0])

    if reduction == "mean":
        return loss_sum / (HW * B - mask_sum + EPSILON)
    elif reduction == "sum":
        return loss_sum
    elif reduction == "none":
        # TODO(synk): reduction='none' (per-pixel loss map) not wired up.
        raise NotImplementedError("reduction='none' is not implemented")
    else:
        # TODO(synk): tensor / 'batch_weighted' weights and
        # equal_category_counts=False are not wired up either.
        raise ValueError('Unknown reduction "%s"' % reduction)


def _reference(x, target):
    """Pure-JAX reference mirroring the PyTorch module (defaults), with
    empty-target pixels excluded (the module's evident intent)."""
    lsm = jax.nn.log_softmax(x.astype(jnp.float32), axis=1)
    t = target.astype(jnp.float32)
    count = t.sum(axis=1)
    mask_inv = (count == 0).astype(jnp.float32)
    safe = jnp.where(count > 0, count, 1.0)
    loss_px = -(t * lsm).sum(axis=1) / safe * (1.0 - mask_inv)
    denom = math.prod(x.shape[2:]) * x.shape[0] - mask_inv.sum() + EPSILON
    return loss_px.sum() / denom


def _make_inputs(key, B, C, H, W):
    k1, k2 = jax.random.split(key)
    x = jax.random.normal(k1, (B, C, H, W), dtype=jnp.float32)
    # Multi-hot categorical mask; ensure every pixel has >= 1 active category.
    logits_t = jax.random.normal(k2, (B, C, H, W), dtype=jnp.float32)
    target = logits_t > 0.0
    argmax_onehot = jax.nn.one_hot(jnp.argmax(logits_t, axis=1), C, axis=1) > 0
    target = jnp.logical_or(target, argmax_onehot)
    # Stream targets in a narrow dtype (0/1 mask): int8 cuts HBM read traffic
    # ~1.6x vs f32 for this memory-bound kernel; the kernel casts in VMEM.
    return x, target.astype(jnp.int8)


if __name__ == "__main__":
    key = jax.random.PRNGKey(0)
    k1, k2 = jax.random.split(key)

    # Case 1: small NCHW, single spatial tile (full-extent lane block).
    x, target = _make_inputs(k1, 2, 4, 16, 16)
    loss = jax.block_until_ready(multi_hot_cross_entropy_loss(x, target))
    ref = _reference(x, target)
    assert jnp.allclose(loss, ref, rtol=1e-5, atol=1e-5), (loss, ref)

    # Case 2: H*W = 2304 with a forced 512-lane tile -> 5 tiles split across
    # 2 "parallel" spatial shards (3 tiles each): exercises multi-tile
    # accumulation, the phantom-tile clamp and ragged-column masking.
    x2, target2 = _make_inputs(k2, 1, 4, 48, 48)
    loss2 = jax.block_until_ready(
        multi_hot_cross_entropy_loss(x2, target2, max_hw_tile=512))
    ref2 = _reference(x2, target2)
    assert jnp.allclose(loss2, ref2, rtol=1e-5, atol=1e-5), (loss2, ref2)

    # Case 3: some pixels with no active category -> excluded from both the
    # numerator and the denominator (mask_invalid path).
    target3 = target.at[:, :, :4, :].set(0)
    loss3 = jax.block_until_ready(multi_hot_cross_entropy_loss(x, target3))
    ref3 = _reference(x, target3)
    assert jnp.allclose(loss3, ref3, rtol=1e-5, atol=1e-5), (loss3, ref3)

    print("KERNEL_OK")
</pallas_src>

<mosaic_0001>
module attributes {stable_mosaic.version = 11 : i64} {
  func.func @_mhce_kernel(%arg0: i32, %arg1: i32, %arg2: i32, %arg3: memref<1x4x256xf32, #tpu.memory_space<vmem>>, %arg4: memref<1x4x256xi8, #tpu.memory_space<vmem>>, %arg5: memref<1x1x2x1xf32, #tpu.memory_space<vmem>>, %arg6: memref<2x256xf32, #tpu.memory_space<vmem>>) attributes {dimension_semantics = [#tpu.dimension_semantics<parallel>, #tpu.dimension_semantics<parallel>, #tpu.dimension_semantics<arbitrary>], iteration_bounds = array<i64: 2, 1, 1>, scalar_prefetch = 0 : i64, scratch_operands = 1 : i64, tpu.core_type = #tpu.core_type<tc>, window_params = [{transform_indices = @transform_0, window_bounds = array<i64: 1, 4, 256>}, {transform_indices = @transform_1, window_bounds = array<i64: 1, 4, 256>}, {transform_indices = @transform_2, window_bounds = array<i64: 1, 1, 2, 1>}]} {
    %c0_i32 = arith.constant 0 : i32
    %0 = arith.cmpi eq, %arg2, %c0_i32 : i32
    %1 = arith.extui %0 : i1 to i32
    %c0_i32_0 = arith.constant 0 : i32
    %2 = arith.cmpi ne, %1, %c0_i32_0 : i32
    scf.if %2 {
      %cst_22 = arith.constant 0.000000e+00 : f32
      %44 = vector.broadcast %cst_22 : f32 to vector<2x256xf32>
      %c0_23 = arith.constant 0 : index
      %c0_24 = arith.constant 0 : index
      %45 = vector.load %arg6[%c0_23, %c0_24] : memref<2x256xf32, #tpu.memory_space<vmem>>, vector<2x256xf32>
      tpu.vector_store %arg6[%c0_23, %c0_24], %44 {strides = array<i32>} : memref<2x256xf32, #tpu.memory_space<vmem>>, vector<2x256xf32>,
    } else {
    }
    %c0 = arith.constant 0 : index
    %c0_1 = arith.constant 0 : index
    %c0_2 = arith.constant 0 : index
    %3 = vector.load %arg3[%c0, %c0_1, %c0_2] : memref<1x4x256xf32, #tpu.memory_space<vmem>>, vector<1x4x256xf32>
    %4 = vector.shape_cast %3 : vector<1x4x256xf32> to vector<4x256xf32>
    %c0_3 = arith.constant 0 : index
    %c0_4 = arith.constant 0 : index
    %c0_5 = arith.constant 0 : index
    %5 = vector.load %arg4[%c0_3, %c0_4, %c0_5] : memref<1x4x256xi8, #tpu.memory_space<vmem>>, vector<1x4x256xi8>
    %6 = vector.shape_cast %5 : vector<1x4x256xi8> to vector<4x256xi8>
    %7 = arith.sitofp %6 : vector<4x256xi8> to vector<4x256xf32>
    %cst = arith.constant dense<0xFF800000> : vector<256xf32>
    %8 = vector.multi_reduction <maximumf>, %4, %cst [0] : vector<4x256xf32> to vector<256xf32>
    %9 = vector.shape_cast %8 : vector<256xf32> to vector<1x256xf32>
    %10 = vector.broadcast %9 : vector<1x256xf32> to vector<4x256xf32>
    %11 = arith.subf %4, %10 : vector<4x256xf32>
    %12 = math.exp %11 : vector<4x256xf32>
    %cst_6 = arith.constant dense<0.000000e+00> : vector<256xf32>
    %13 = vector.multi_reduction <add>, %12, %cst_6 [0] : vector<4x256xf32> to vector<256xf32>
    %14 = vector.shape_cast %13 : vector<256xf32> to vector<1x256xf32>
    %15 = math.log %14 : vector<1x256xf32>
    %16 = arith.addf %9, %15 : vector<1x256xf32>
    %cst_7 = arith.constant dense<0.000000e+00> : vector<256xf32>
    %17 = vector.multi_reduction <add>, %7, %cst_7 [0] : vector<4x256xf32> to vector<256xf32>
    %18 = vector.shape_cast %17 : vector<256xf32> to vector<1x256xf32>
    %19 = arith.mulf %7, %4 : vector<4x256xf32>
    %cst_8 = arith.constant dense<0.000000e+00> : vector<256xf32>
    %20 = vector.multi_reduction <add>, %19, %cst_8 [0] : vector<4x256xf32> to vector<256xf32>
    %21 = vector.shape_cast %20 : vector<256xf32> to vector<1x256xf32>
    %22 = arith.mulf %18, %16 : vector<1x256xf32>
    %23 = arith.subf %21, %22 : vector<1x256xf32>
    %cst_9 = arith.constant 0.000000e+00 : f32
    %24 = vector.broadcast %cst_9 : f32 to vector<1x256xf32>
    %25 = arith.cmpf oeq, %18, %24 : vector<1x256xf32>
    %26 = arith.extui %25 : vector<1x256xi1> to vector<1x256xi32>
    %27 = arith.sitofp %26 : vector<1x256xi32> to vector<1x256xf32>
    %cst_10 = arith.constant 0.000000e+00 : f32
    %28 = vector.broadcast %cst_10 : f32 to vector<1x256xf32>
    %29 = arith.cmpf ogt, %18, %28 : vector<1x256xf32>
    %cst_11 = arith.constant 0.000000e+00 : f32
    %30 = vector.broadcast %cst_11 : f32 to vector<1x256xf32>
    %31 = arith.subf %30, %23 : vector<1x256xf32>
    %32 = arith.divf %31, %18 : vector<1x256xf32>
    %cst_12 = arith.constant 0.000000e+00 : f32
    %33 = vector.broadcast %cst_12 : f32 to vector<1x256xf32>
    %34 = arith.select %29, %32, %33 : vector<1x256xi1>, vector<1x256xf32>
    %c0_13 = arith.constant 0 : index
    %c0_14 = arith.constant 0 : index
    %35 = vector.load %arg6[%c0_13, %c0_14] : memref<2x256xf32, #tpu.memory_space<vmem>>, vector<1x256xf32>
    %36 = arith.addf %35, %34 : vector<1x256xf32>
    %c0_15 = arith.constant 0 : index
    %c0_16 = arith.constant 0 : index
    %37 = vector.load %arg6[%c0_15, %c0_16] : memref<2x256xf32, #tpu.memory_space<vmem>>, vector<1x256xf32>
    tpu.vector_store %arg6[%c0_15, %c0_16], %36 {strides = array<i32>} : memref<2x256xf32, #tpu.memory_space<vmem>>, vector<1x256xf32>,
    %c1 = arith.constant 1 : index
    %c0_17 = arith.constant 0 : index
    %38 = vector.load %arg6[%c1, %c0_17] : memref<2x256xf32, #tpu.memory_space<vmem>>, vector<1x256xf32>
    %39 = arith.addf %38, %27 : vector<1x256xf32>
    %c1_18 = arith.constant 1 : index
    %c0_19 = arith.constant 0 : index
    %40 = vector.load %arg6[%c1_18, %c0_19] : memref<2x256xf32, #tpu.memory_space<vmem>>, vector<1x256xf32>
    tpu.vector_store %arg6[%c1_18, %c0_19], %39 {strides = array<i32>} : memref<2x256xf32, #tpu.memory_space<vmem>>, vector<1x256xf32>,
    %c0_i32_20 = arith.constant 0 : i32
    %41 = arith.cmpi eq, %arg2, %c0_i32_20 : i32
    %42 = arith.extui %41 : i1 to i32
    %c0_i32_21 = arith.constant 0 : i32
    %43 = arith.cmpi ne, %42, %c0_i32_21 : i32
    scf.if %43 {
      %c0_22 = arith.constant 0 : index
      %c0_23 = arith.constant 0 : index
      %44 = vector.load %arg6[%c0_22, %c0_23] : memref<2x256xf32, #tpu.memory_space<vmem>>, vector<2x256xf32>
      %cst_24 = arith.constant dense<0.000000e+00> : vector<2xf32>
      %45 = vector.multi_reduction <add>, %44, %cst_24 [1] : vector<2x256xf32> to vector<2xf32>
      %46 = vector.shape_cast %45 : vector<2xf32> to vector<2x1xf32>
      %47 = vector.shape_cast %46 : vector<2x1xf32> to vector<1x1x2x1xf32>
      %c0_25 = arith.constant 0 : index
      %c0_26 = arith.constant 0 : index
      %c0_27 = arith.constant 0 : index
      %c0_28 = arith.constant 0 : index
      %48 = vector.load %arg5[%c0_25, %c0_26, %c0_27, %c0_28] : memref<1x1x2x1xf32, #tpu.memory_space<vmem>>, vector<1x1x2x1xf32>
      tpu.vector_store %arg5[%c0_25, %c0_26, %c0_27, %c0_28], %47 {strides = array<i32>} : memref<1x1x2x1xf32, #tpu.memory_space<vmem>>, vector<1x1x2x1xf32>,
    } else {
    }
    return
  }
  func.func @transform_0(%arg0: i32, %arg1: i32, %arg2: i32) -> (i32, i32, i32) {
    %c1_i32 = arith.constant 1 : i32
    %0 = arith.muli %arg1, %c1_i32 : i32
    %1 = arith.addi %0, %arg2 : i32
    %c0_i32 = arith.constant 0 : i32
    %2 = arith.minsi %1, %c0_i32 : i32
    %c0_i32_0 = arith.constant 0 : i32
    %c0_i32_1 = arith.constant 0 : i32
    return %arg0, %c0_i32_0, %2 : i32, i32, i32
  }
  func.func @transform_1(%arg0: i32, %arg1: i32, %arg2: i32) -> (i32, i32, i32) {
    %c1_i32 = arith.constant 1 : i32
    %0 = arith.muli %arg1, %c1_i32 : i32
    %1 = arith.addi %0, %arg2 : i32
    %c0_i32 = arith.constant 0 : i32
    %2 = arith.minsi %1, %c0_i32 : i32
    %c0_i32_0 = arith.constant 0 : i32
    %c0_i32_1 = arith.constant 0 : i32
    return %arg0, %c0_i32_0, %2 : i32, i32, i32
  }
  func.func @transform_2(%arg0: i32, %arg1: i32, %arg2: i32) -> (i32, i32, i32, i32) {
    %c0_i32 = arith.constant 0 : i32
    %c0_i32_0 = arith.constant 0 : i32
    %c0_i32_1 = arith.constant 0 : i32
    return %arg0, %arg1, %c0_i32, %c0_i32_0 : i32, i32, i32, i32
  }
}

</mosaic_0001>

<llo_original>
// kernel: tpu_custom_call.1
$region0: #{tpu_custom_call.1}
  #allocation0 [shape = 'u32[]', space=smem, size = 0x4, offset = 0x4, fixed_abs, tag = 'smem constant byte address 0x4 - core index']
  #allocation1 [shape = 'u32[144,128]{1,0:T(1,128)}', space=vmem, size = 0x12000, scoped, tag = 'internal scratch']
  #allocation2 [shape = 'f32[2,256]{1,0:T(2,128)}', space=vmem, size = 0x800, scoped, tag = 'scratch operand']
  %s0 = inlined_call_operand.hbm [shape: f32[2,4,256], index: 0, kind: input, shape index: {}]
  %s1 = inlined_call_operand.hbm [shape: s8[2,4,256], index: 1, kind: input, shape index: {}]
  %s2 = inlined_call_operand.vmem [shape: f32[2,1,2,1], index: 2, kind: output, shape index: {}]
  %s3 = sld [smem:[#allocation0]]
  $region57: #{tpu_custom_call.1} parent=0
    _
  %s5 = ssub.s32 1, %s3
  %s6 = scalar_select 0, %s5, %s3
  $region1: #{tpu_custom_call.1} parent=0
    #allocation3 [shape = 'u8[8192]{0}', space=vmem, size = 0x2000, scoped, tag = 'input window, operand 0']
    #allocation4 [shape = 's32[2]{0}', space=sflag, size = 0x8, scoped, tag = 'scoped memory for tpu_custom_call.1']
    #allocation5 [shape = 'u8[2048]{0}', space=vmem, size = 0x800, scoped, tag = 'input window, operand 1']
    #allocation6 [shape = 's32[2]{0}', space=sflag, size = 0x8, scoped, tag = 'scoped memory for tpu_custom_call.1']
    %7 = vsyncpa [#allocation4], 0
    %s8 = scalar_lea.sflag [#allocation4], 1
    %9 = vsyncpa %s8, 0
    %10 = vsyncpa [#allocation6], 0
    %s11 = scalar_lea.sflag [#allocation6], 1
    %12 = vsyncpa %s11, 0
    loop: start=0, step=1, limit=4
    $region2: #{tpu_custom_call.1} parent=1 // loop_pre_header
      _
    $region3: #{tpu_custom_call.1} parent=1 // loop_header
      %s14 = sphi 0, %s18
      %p15 = scmp.ge.s32.totalorder %s14, 4
      %s21 = sphi 0, %s40
      %s22 = sphi 0, %s36
      %s23 = sphi 0, %s32
      %s24 = sphi 0, %s21
      %s25 = sphi 0, %s22
      %s26 = sphi 0, %s23
      %s27 = sphi 0, %s24
      %s28 = sphi 0, %s25
      %s29 = sphi 0, %s26
      %s51 = sphi 0, %s53
      %s54 = sphi 0, %s51
      %s55 = sphi 0, %s54
      %s71 = sphi 0, %s55
      %s85 = sphi 0, %s87
      %s88 = sphi 0, %s85
      %s89 = sphi 0, %s88
      %s105 = sphi 0, %s89
      %s113 = sphi 0, %s115
      %s116 = sphi 0, %s113
      %s117 = sphi 0, %s116
      %s133 = sphi 0, %s117
    $region4: #{tpu_custom_call.1} parent=1 // loop_header_branch
      %17 = sbr.rel (%p15) target = $region8
    $region5: #{tpu_custom_call.1} parent=1 // loop_body
      %s19 = ssub.s32 %s14, 1
      %s20 = ssub.s32 %s14, 2
      %s30 = sadd.s32 1, %s23
      %p31 = scmp.ge.s32.totalorder %s30, 1
      %s32 = scalar_select %p31, 0, %s30
      %s33 = sadd.s32 1, %s22
      %s34 = scalar_select %p31, %s33, %s22
      %p35 = scmp.ge.s32.totalorder %s34, 1
      %s36 = scalar_select %p35, 0, %s34
      %s37 = sadd.s32 1, %s21
      %s38 = scalar_select %p35, %s37, %s21
      %p39 = scmp.ge.s32.totalorder %s38, 2
      %s40 = scalar_select %p39, 0, %s38
      %s41 = sadd.s32 %s22, %s23
      %p42 = scmp.lt.s32.totalorder %s41, 0
      %s43 = scalar_select %p42, %s41, 0
      %s44 = sadd.s32 %s36, %s32
      %p45 = scmp.lt.s32.totalorder %s44, 0
      %s46 = scalar_select %p45, %s44, 0
      %s47 = ssub.s32 %s21, %s40
      %s48 = ssub.s32 %s43, %s46
      %s49 = sor.u32 %s47, %s48
      %p50 = scmp.eq.s32.totalorder %s49, 0
      %s52 = sadd.s32 %s51, 1
      %s53 = scalar_select %p50, %s51, %s52
      %p56 = pneg %p50
      %p57 = scmp.eq.s32.totalorder %s14, 1
      %p58 = por %p56, %p57
      %p59 = scmp.ne.s32.totalorder %s51, %s54
      %p60 = scmp.eq.s32.totalorder %s14, 0
      %p61 = por %p59, %p60
      %p62 = scmp.ne.s32.totalorder %s51, %s54
      %p63 = scmp.eq.s32.totalorder %s19, 1
      %p64 = por %p62, %p63
      %p65 = scmp.ne.s32.totalorder %s54, %s55
      %p66 = scmp.eq.s32.totalorder %s19, 0
      %p67 = por %p65, %p66
      %p68 = scmp.ne.s32.totalorder %s54, %s55
      %p69 = scmp.eq.s32.totalorder %s20, 1
      %p70 = por %p68, %p69
      %p72 = scmp.ne.s32.totalorder %s55, %s71
      %p73 = scmp.eq.s32.totalorder %s20, 0
      %p74 = por %p72, %p73
      %s75 = sadd.s32 %s22, %s23
      %p76 = scmp.lt.s32.totalorder %s75, 0
      %s77 = scalar_select %p76, %s75, 0
      %s78 = sadd.s32 %s36, %s32
      %p79 = scmp.lt.s32.totalorder %s78, 0
      %s80 = scalar_select %p79, %s78, 0
      %s81 = ssub.s32 %s21, %s40
      %s82 = ssub.s32 %s77, %s80
      %s83 = sor.u32 %s81, %s82
      %p84 = scmp.eq.s32.totalorder %s83, 0
      %s86 = sadd.s32 %s85, 1
      %s87 = scalar_select %p84, %s85, %s86
      %p90 = pneg %p84
      %p91 = scmp.eq.s32.totalorder %s14, 1
      %p92 = por %p90, %p91
      %p93 = scmp.ne.s32.totalorder %s85, %s88
      %p94 = scmp.eq.s32.totalorder %s14, 0
      %p95 = por %p93, %p94
      %p96 = scmp.ne.s32.totalorder %s85, %s88
      %p97 = scmp.eq.s32.totalorder %s19, 1
      %p98 = por %p96, %p97
      %p99 = scmp.ne.s32.totalorder %s88, %s89
      %p100 = scmp.eq.s32.totalorder %s19, 0
      %p101 = por %p99, %p100
      %p102 = scmp.ne.s32.totalorder %s88, %s89
      %p103 = scmp.eq.s32.totalorder %s20, 1
      %p104 = por %p102, %p103
      %p106 = scmp.ne.s32.totalorder %s89, %s105
      %p107 = scmp.eq.s32.totalorder %s20, 0
      %p108 = por %p106, %p107
      %s109 = ssub.s32 %s21, %s40
      %s110 = ssub.s32 %s22, %s36
      %s111 = sor.u32 %s109, %s110
      %p112 = scmp.eq.s32.totalorder %s111, 0
      %s114 = sadd.s32 %s113, 1
      %s115 = scalar_select %p112, %s113, %s114
      %p118 = pneg %p112
      %p119 = scmp.eq.s32.totalorder %s14, 1
      %p120 = por %p118, %p119
      %p121 = scmp.ne.s32.totalorder %s113, %s116
      %p122 = scmp.eq.s32.totalorder %s14, 0
      %p123 = por %p121, %p122
      %p124 = scmp.ne.s32.totalorder %s113, %s116
      %p125 = scmp.eq.s32.totalorder %s19, 1
      %p126 = por %p124, %p125
      %p127 = scmp.ne.s32.totalorder %s116, %s117
      %p128 = scmp.eq.s32.totalorder %s19, 0
      %p129 = por %p127, %p128
      %p130 = scmp.ne.s32.totalorder %s116, %s117
      %p131 = scmp.eq.s32.totalorder %s20, 1
      %p132 = por %p130, %p131
      %p134 = scmp.ne.s32.totalorder %s117, %s133
      %p135 = scmp.eq.s32.totalorder %s20, 0
      %p136 = por %p134, %p135
      %p137 = scmp.le.s32.totalorder 1, %s14
      %p138 = scmp.lt.s32.totalorder %s14, 3
      %p139 = pnand %p137, %p138
      %p140 = pneg %p139
      // Predicated region
      $region9: #{tpu_custom_call.1} parent=5 // pred_check
        _
      $region10: #{tpu_custom_call.1} parent=5 // pred_check_branch
        %142 = sbr.rel (%p139) target = $region12
      $region11: #{tpu_custom_call.1} parent=5 // pred_region
        %s143 = ssub.s32 %s14, 1
      $region12: #{tpu_custom_call.1} parent=5 // pred_fallthru
        _
      %p144 = scmp.lt.s32.totalorder %s14, 2
      // Predicated region
      $region13: #{tpu_custom_call.1} parent=5 // pred_check
        %p145 = pneg %p144
      $region14: #{tpu_custom_call.1} parent=5 // pred_check_branch
        %147 = sbr.rel (%p145) target = $region16
      $region15: #{tpu_custom_call.1} parent=5 // pred_region
        // Predicated region
        $region17: #{tpu_custom_call.1} parent=15 // pred_check
          %p148 = pneg %p61
        $region18: #{tpu_custom_call.1} parent=15 // pred_check_branch
          %150 = sbr.rel (%p148) target = $region20
        $region19: #{tpu_custom_call.1} parent=15 // pred_region
          %s151 = sand.u32 %s51, 1
          %s152 = scalar_lea.sflag [#allocation4], %s151
          %s153 = sand.u32 %s51, 1
          %s154 = smul.addr %s153, 8
          %s155 = scalar_lea.vmem [#allocation3], %s154
          %s156 = sadd.s32 %s22, %s23
          %p157 = scmp.lt.s32.totalorder %s156, 0
          %s158 = scalar_select %p157, %s156, 0
          %s159 = smul.u32 2, %s158
          %s161 = ssub.s32 128, 128
          %162 = vsyncadd %s152, %s161
          %s163 = smul.addr %s21, 2
          %s164 = sadd.s32 %s159, %s163
          %s165 = smul.addr %s164, 64
          %s166 = scalar_lea.hbm %s0, %s165
          %s168 = sshll.u32 %s155, 4
          %s169 = int_to_ptr.vmem [resolvable:$true] %s168
          %171 = dma.hbm_to_vmem [thread:$0]  %s166, 128, %s169, %s152
        $region20: #{tpu_custom_call.1} parent=15 // pred_fallthru
          _
        // Predicated region
        $region21: #{tpu_custom_call.1} parent=15 // pred_check
          %p172 = pneg %p95
        $region22: #{tpu_custom_call.1} parent=15 // pred_check_branch
          %174 = sbr.rel (%p172) target = $region24
        $region23: #{tpu_custom_call.1} parent=15 // pred_region
          %s175 = sand.u32 %s85, 1
          %s176 = scalar_lea.sflag [#allocation6], %s175
          %s177 = sand.u32 %s85, 1
          %s178 = smul.addr %s177, 2
          %s179 = scalar_lea.vmem [#allocation5], %s178
          %s180 = sadd.s32 %s22, %s23
          %p181 = scmp.lt.s32.totalorder %s180, 0
          %s182 = scalar_select %p181, %s180, 0
          %s183 = smul.u32 2, %s182
          %s185 = ssub.s32 32, 32
          %186 = vsyncadd %s176, %s185
          %s187 = smul.addr %s21, 2
          %s188 = sadd.s32 %s183, %s187
          %s189 = smul.addr %s188, 16
          %s190 = scalar_lea.hbm %s1, %s189
          %s192 = sshll.u32 %s179, 4
          %s193 = int_to_ptr.vmem [resolvable:$true] %s192
          %195 = dma.hbm_to_vmem [thread:$0]  %s190, 32, %s193, %s176
        $region24: #{tpu_custom_call.1} parent=15 // pred_fallthru
          _
      $region16: #{tpu_custom_call.1} parent=5 // pred_fallthru
        _
      %p196 = scmp.le.s32.totalorder 1, %s14
      %p197 = scmp.lt.s32.totalorder %s14, 3
      %p198 = pnand %p196, %p197
      %p199 = pneg %p198
      // Predicated region
      $region25: #{tpu_custom_call.1} parent=5 // pred_check
        _
      $region26: #{tpu_custom_call.1} parent=5 // pred_check_branch
        %201 = sbr.rel (%p198) target = $region28
      $region27: #{tpu_custom_call.1} parent=5 // pred_region
        %s202 = ssub.s32 %s14, 1
        %s203 = sand.u32 %s54, 1
        %s204 = scalar_lea.sflag [#allocation4], %s203
        %s205 = sand.u32 %s54, 1
        %s206 = smul.addr %s205, 8
        %s207 = scalar_lea.vmem [#allocation3], %s206
        // Predicated region
        $region29: #{tpu_custom_call.1} parent=27 // pred_check
          %p208 = pneg %p67
        $region30: #{tpu_custom_call.1} parent=27 // pred_check_branch
          %210 = sbr.rel (%p208) target = $region32
        $region31: #{tpu_custom_call.1} parent=27 // pred_region
          %211 = dma.done %s204, 128
        $region32: #{tpu_custom_call.1} parent=27 // pred_fallthru
          _
        %s212 = sand.u32 %s88, 1
        %s213 = scalar_lea.sflag [#allocation6], %s212
        %s214 = sand.u32 %s88, 1
        %s215 = smul.addr %s214, 2
        %s216 = scalar_lea.vmem [#allocation5], %s215
        // Predicated region
        $region33: #{tpu_custom_call.1} parent=27 // pred_check
          %p217 = pneg %p101
        $region34: #{tpu_custom_call.1} parent=27 // pred_check_branch
          %219 = sbr.rel (%p217) target = $region36
        $region35: #{tpu_custom_call.1} parent=27 // pred_region
          %220 = dma.done %s213, 32
        $region36: #{tpu_custom_call.1} parent=27 // pred_fallthru
          _
        %s221 = sand.u32 %s54, 1
        %s222 = scalar_lea.sflag [#allocation4], %s221
        %s223 = sand.u32 %s54, 1
        %s224 = smul.addr %s223, 8
        %s225 = scalar_lea.vmem [#allocation3], %s224
        %p226 = pneg %p67
        %p227 = pneg %p64
        %s228 = sand.u32 %s88, 1
        %s229 = scalar_lea.sflag [#allocation6], %s228
        %s230 = sand.u32 %s88, 1
        %s231 = smul.addr %s230, 2
        %s232 = scalar_lea.vmem [#allocation5], %s231
        %p233 = pneg %p101
        %p234 = pneg %p98
        %p235 = pneg %p129
        %p236 = pneg %p126
        %p237 = scmp.lt.s32.totalorder %s24, 1
        %s238 = scalar_select %p237, %s24, 1
        %p239 = scmp.lt.s32.totalorder %s25, 0
        %s240 = scalar_select %p239, %s25, 0
        %s241 = sadd.s32 %s240, %s238
        %s242 = smul.addr %s241, 2
        %s243 = scalar_lea.vmem %s2, %s242
        %s244 = sadd.s32 %s25, %s26
        %p245 = scmp.lt.s32.totalorder %s244, 0
        %s246 = scalar_select %p245, %s244, 0
        %s247 = smul.u32 2, %s246
        %s248 = sadd.s32 %s25, %s26
        %p249 = scmp.lt.s32.totalorder %s248, 0
        %s250 = scalar_select %p249, %s248, 0
        %s251 = smul.u32 2, %s250
        %p252 = scmp.lt.s32.totalorder %s24, 1
        %s253 = scalar_select %p252, %s24, 1
        %p254 = scmp.lt.s32.totalorder %s25, 0
        %s255 = scalar_select %p254, %s25, 0
        %s256 = sadd.s32 %s255, %s253
        %s257 = smul.addr %s256, 2
        %s258 = scalar_lea.vmem %s2, %s257
        %p259 = scmp.eq.s32.totalorder %s26, 0
        // Predicated region
        $region37: #{tpu_custom_call.1} parent=27 // pred_check
          %p260 = pneg %p259
        $region38: #{tpu_custom_call.1} parent=27 // pred_check_branch
          %262 = sbr.rel (%p260) target = $region40
        $region39: #{tpu_custom_call.1} parent=27 // pred_region
          %263 = vst [vmem:[#allocation2] sm:$0xf] 0.0
        $region40: #{tpu_custom_call.1} parent=27 // pred_fallthru
          _
        %v264 = vld [vmem:[%s207] sm:$0xff]
        %v265 = vld [vmem:[%s216] sm:$0x3]
        %v266 = vunpack.c.0.s8 %v265
        %v267 = vcvt.s32.f32 %v266
        %v269 = vcombine.high %v264, %v264
        %vm271 = vcmask 1043456
        %v272 = vsel %vm271, %v264, -inf
        %v273 = vrot.slane %v272, 4
        %v274 = vmax.f32 %v272, %v273
        %v275 = vrot.slane %v274, 2
        %v276 = vmax.f32 %v274, %v275
        %v277 = vrot.slane %v276, 1
        %v278 = vmax.f32 %v276, %v277
        %v279 = vsel %vm271, %v269, -inf
        %v280 = vrot.slane %v279, 4
        %v281 = vmax.f32 %v279, %v280
        %v282 = vrot.slane %v281, 2
        %v283 = vmax.f32 %v281, %v282
        %v284 = vrot.slane %v283, 1
        %v285 = vmax.f32 %v283, %v284
        %v288 = vcombine.low %v278, %v285
        %v290 = vsub.f32 %v264, %v288
        %v291 = vmul.f32 %v290, 1.442695
        %v292 = vpow.pop %v291
        %v294 = vcombine.high %v292, %v292
        %v296 = vsel %vm271, %v292, 0.0
        %v297 = vrot.slane %v296, 4
        %v298 = vadd.f32 %v296, %v297
        %v299 = vrot.slane %v298, 2
        %v300 = vadd.f32 %v298, %v299
        %v301 = vrot.slane %v300, 1
        %v302 = vadd.f32 %v300, %v301
        %v303 = vsel %vm271, %v294, 0.0
        %v304 = vrot.slane %v303, 4
        %v305 = vadd.f32 %v303, %v304
        %v306 = vrot.slane %v305, 2
        %v307 = vadd.f32 %v305, %v306
        %v308 = vrot.slane %v307, 1
        %v309 = vadd.f32 %v307, %v308
        %v310 = vlog2.pop %v302
        %v311 = vmul.f32 %v310, 0.6931472
        %v312 = vlog2.pop %v309
        %v313 = vmul.f32 %v312, 0.6931472
        %v314 = vadd.f32 %v278, %v311
        %v315 = vadd.f32 %v285, %v313
        %v317 = vcombine.high %v267, %v267
        %v319 = vsel %vm271, %v267, 0.0
        %v320 = vrot.slane %v319, 4
        %v321 = vadd.f32 %v319, %v320
        %v322 = vrot.slane %v321, 2
        %v323 = vadd.f32 %v321, %v322
        %v324 = vrot.slane %v323, 1
        %v325 = vadd.f32 %v323, %v324
        %v326 = vsel %vm271, %v317, 0.0
        %v327 = vrot.slane %v326, 4
        %v328 = vadd.f32 %v326, %v327
        %v329 = vrot.slane %v328, 2
        %v330 = vadd.f32 %v328, %v329
        %v331 = vrot.slane %v330, 1
        %v332 = vadd.f32 %v330, %v331
        %v333 = vmul.f32 %v267, %v264
        %v335 = vcombine.high %v333, %v333
        %v337 = vsel %vm271, %v333, 0.0
        %v338 = vrot.slane %v337, 4
        %v339 = vadd.f32 %v337, %v338
        %v340 = vrot.slane %v339, 2
        %v341 = vadd.f32 %v339, %v340
        %v342 = vrot.slane %v341, 1
        %v343 = vadd.f32 %v341, %v342
        %v344 = vsel %vm271, %v335, 0.0
        %v345 = vrot.slane %v344, 4
        %v346 = vadd.f32 %v344, %v345
        %v347 = vrot.slane %v346, 2
        %v348 = vadd.f32 %v346, %v347
        %v349 = vrot.slane %v348, 1
        %v350 = vadd.f32 %v348, %v349
        %v351 = vmul.f32 %v325, %v314
        %v352 = vmul.f32 %v332, %v315
        %v353 = vsub.f32 %v343, %v351
        %v354 = vsub.f32 %v350, %v352
        %vm355 = vcmp.eq.f32.partialorder %v325, 0.0
        %vm356 = vcmp.eq.f32.partialorder %v332, 0.0
        %v357 = vsel %vm355, 1, 0
        %v358 = vsel %vm356, 1, 0
        %v359 = vcvt.s32.f32 %v357
        %v360 = vcvt.s32.f32 %v358
        %vm361 = vcmp.gt.f32.partialorder %v325, 0.0
        %vm362 = vcmp.gt.f32.partialorder %v332, 0.0
        %v363 = vsub.f32 0.0, %v353
        %v364 = vsub.f32 0.0, %v354
        %v365 = vrcp.pop %v325
        %v366 = vmul.f32 %v363, %v365
        %v367 = vrcp.pop %v332
        %v368 = vmul.f32 %v364, %v367
        %v369 = vsel %vm361, %v366, 0.0
        %v370 = vsel %vm362, %v368, 0.0
        %v371 = vld [vmem:[#allocation2] ss:$2 sm:$0x3]
        %v374 = vcombine.low %v369, %v370
        %v376 = vunpack.c.l.s4 1966171168
        %v377 = vunpack.c.0.s8 %v376
        %v378 = vlaneseq
        %v379 = vshrl.u32 %v378, 7
        %v380 = vsub.s32 %v377, %v379
        %v381 = vrot.slane %v374, %v380
        %v383 = vunpack.c.l.s4 1966171168
        %v384 = vunpack.c.0.s8 %v383
        %v385 = vlaneseq
        %v386 = vshrl.u32 %v385, 7
        %v387 = vsub.s32 %v384, %v386
        %v388 = vrot.slane %v381, %v387
        %v390 = vadd.f32 %v371, %v388
        %v391 = vlaneseq
        %vm392 = vcmp.ge.s32.totalorder %v391, 0
        %vm393 = vcmp.lt.s32.totalorder %v391, 256
        %vm394 = vmand %vm392, %vm393
        %395 = vst.msk [vmem:[#allocation2] ss:$2 sm:$0x3] %vm394, %v390
        %s396 = scalar_lea.vmem [#allocation2], 1
        %v397 = vld [vmem:[%s396] ss:$2 sm:$0x3]
        %v400 = vcombine.low %v359, %v360
        %v402 = vunpack.c.l.s4 1966171168
        %v403 = vunpack.c.0.s8 %v402
        %v404 = vlaneseq
        %v405 = vshrl.u32 %v404, 7
        %v406 = vsub.s32 %v403, %v405
        %v407 = vrot.slane %v400, %v406
        %v409 = vunpack.c.l.s4 1966171168
        %v410 = vunpack.c.0.s8 %v409
        %v411 = vlaneseq
        %v412 = vshrl.u32 %v411, 7
        %v413 = vsub.s32 %v410, %v412
        %v414 = vrot.slane %v407, %v413
        %v416 = vadd.f32 %v397, %v414
        %417 = vst.msk [vmem:[%s396] ss:$2 sm:$0x3] %vm394, %v416
        // Predicated region
        $region41: #{tpu_custom_call.1} parent=27 // pred_check
          %p418 = pneg %p259
        $region42: #{tpu_custom_call.1} parent=27 // pred_check_branch
          %420 = sbr.rel (%p418) target = $region44
        $region43: #{tpu_custom_call.1} parent=27 // pred_region
          %v421 = vld [vmem:[#allocation2] sm:$0xf]
          %v424 = vunpack.c.l.s4 1983009808
          %v425 = vunpack.c.0.s8 %v424
          %v426 = vlaneseq
          %v427 = vshrl.u32 %v426, 7
          %v428 = vsub.s32 %v425, %v427
          %v429 = vrot.slane %v421, %v428
          %v430 = vcombine.high %v429, %v429
          %vm433 = vcmask 1041408
          %v434 = vsel %vm433, %v429, 0.0
          %v435 = vsel %vm433, %v430, 0.0
          %v436 = vadd.f32 %v434, %v435
          %437 = vadd.xlane.f32.xlu0 %v436
          %v438 = vpop.xlane.xlu0 %437
          %vm439 = vcmask 1024
          %440 = vst.msk [vmem:[%s258] sm:$0x3] %vm439, %v438
        $region44: #{tpu_custom_call.1} parent=27 // pred_fallthru
          _
        %p441 = scmp.lt.s32.totalorder %s24, 1
        %s442 = scalar_select %p441, %s24, 1
        %p443 = scmp.lt.s32.totalorder %s25, 0
        %s444 = scalar_select %p443, %s25, 0
        %s445 = sadd.s32 %s444, %s442
        %s446 = smul.addr %s445, 2
        %s447 = scalar_lea.vmem %s2, %s446
        // Predicated region
        $region45: #{tpu_custom_call.1} parent=27 // pred_check
          %p448 = pneg %p126
        $region46: #{tpu_custom_call.1} parent=27 // pred_check_branch
          %450 = sbr.rel (%p448) target = $region48
        $region47: #{tpu_custom_call.1} parent=27 // pred_region
          _
        $region48: #{tpu_custom_call.1} parent=27 // pred_fallthru
          _
      $region28: #{tpu_custom_call.1} parent=5 // pred_fallthru
        _
      %p451 = scmp.le.s32.totalorder 2, %s14
      // Predicated region
      $region49: #{tpu_custom_call.1} parent=5 // pred_check
        %p452 = pneg %p451
      $region50: #{tpu_custom_call.1} parent=5 // pred_check_branch
        %454 = sbr.rel (%p452) target = $region52
      $region51: #{tpu_custom_call.1} parent=5 // pred_region
        %s455 = ssub.s32 %s14, 2
        // Predicated region
        $region53: #{tpu_custom_call.1} parent=51 // pred_check
          %p456 = pneg %p132
        $region54: #{tpu_custom_call.1} parent=51 // pred_check_branch
          %458 = sbr.rel (%p456) target = $region56
        $region55: #{tpu_custom_call.1} parent=51 // pred_region
          %p459 = scmp.lt.s32.totalorder %s27, 1
          %s460 = scalar_select %p459, %s27, 1
          %p461 = scmp.lt.s32.totalorder %s28, 0
          %s462 = scalar_select %p461, %s28, 0
          %s463 = sadd.s32 %s462, %s460
          %s464 = smul.addr %s463, 2
          %s465 = scalar_lea.vmem %s2, %s464
        $region56: #{tpu_custom_call.1} parent=51 // pred_fallthru
          _
      $region52: #{tpu_custom_call.1} parent=5 // pred_fallthru
        _
    $region6: #{tpu_custom_call.1} parent=1 // loop_footer
      %s18 = sadd.s32 1, %s14
    $region7: #{tpu_custom_call.1} parent=1 // loop_footer_branch
      %13 = sbr.rel target = $region3
    $region8: #{tpu_custom_call.1} parent=1 // loop_exit
      _
    %466 = vsyncpa [#allocation4], 1
    %s467 = scalar_lea.sflag [#allocation4], 1
    %468 = vsyncpa %s467, 1
    %469 = vsyncpa [#allocation6], 1
    %s470 = scalar_lea.sflag [#allocation6], 1
    %471 = vsyncpa %s470, 1

</llo_original>
